<compile_context>
chip_gen: v7x
topology: tpu7x:2x2x1
jax: 0.10.0
libtpu: 0.0.40
codegen_flags: <defaults>
</compile_context>

<pallas_src>
import functools

import jax
import jax.numpy as jnp
from jax.experimental import pallas as pl
from jax.experimental.pallas import tpu as pltpu

EVENT_DIM = 609          # logical K of the event encoder's first Linear
HIDDEN = 128
K_PAD = 640              # 609 padded up to 5*128 lanes (zero-padded, exact)
N_PAD = 128              # nclass padded up to one full lane group


def _round_up(x, m):
    return ((x + m - 1) // m) * m


def ehr_forward_kernel(event_ref, hcc_ref,
                       w1_ref, b1_ref,
                       w2_ref, b2_ref,
                       wf_e_ref, wf_h_ref, bf_ref,
                       out_ref):
    # MLP event encoder (readout == Identity). bf16 operands, f32 accumulate.
    h1 = jnp.dot(event_ref[...], w1_ref[...],
                 preferred_element_type=jnp.float32) + b1_ref[...]
    h1 = jnp.maximum(h1, 0.0).astype(jnp.bfloat16)
    h2 = jnp.dot(h1, w2_ref[...],
                 preferred_element_type=jnp.float32) + b2_ref[...]
    h2 = jnp.maximum(h2, 0.0).astype(jnp.bfloat16)
    # fc over concat([event_embeds, partialHCC]) == split-weight matmuls.
    logits = (jnp.dot(h2, wf_e_ref[...], preferred_element_type=jnp.float32)
              + jnp.dot(hcc_ref[...], wf_h_ref[...],
                        preferred_element_type=jnp.float32)
              + bf_ref[...])
    out_ref[...] = logits.astype(out_ref.dtype)


@functools.partial(jax.jit, static_argnames=("tile_b",))
def ehr_forward(event, partial_hcc, kparams, tile_b=256):
    """event: (B, 609) f32, partial_hcc: (B, nclass) f32 -> (B, nclass) f32.

    kparams: output of prepare_params() (padded, bf16 weights / f32 biases).
    """
    B = event.shape[0]
    nclass = partial_hcc.shape[1]
    w1, b1, w2, b2, wf_e, wf_h, bf = kparams

    tile_b = min(tile_b, _round_up(B, 8))
    b_pad = _round_up(B, tile_b)
    grid = (b_pad // tile_b,)

    # Pad batch, K (609->640) and the partialHCC lane dim (nclass->128);
    # zero padding is numerically exact.  Cast matmul operands to bf16.
    ev = jnp.zeros((b_pad, K_PAD), jnp.bfloat16)
    ev = ev.at[:B, :EVENT_DIM].set(event.astype(jnp.bfloat16))
    hcc = jnp.zeros((b_pad, N_PAD), jnp.bfloat16)
    hcc = hcc.at[:B, :nclass].set(partial_hcc.astype(jnp.bfloat16))

    def act_spec(cols):       # batch-tiled activations
        return pl.BlockSpec((tile_b, cols), lambda i: (i, 0))

    def res_spec(shape):      # weights/biases resident in VMEM (one DMA total)
        return pl.BlockSpec(shape, lambda i: (0, 0))

    flops = 2 * b_pad * (K_PAD * HIDDEN + HIDDEN * HIDDEN
                         + HIDDEN * N_PAD + N_PAD * N_PAD)
    bytes_accessed = (ev.size * 2 + hcc.size * 2 + b_pad * N_PAD * 4
                      + sum(int(p.size) * p.dtype.itemsize for p in kparams))

    out = pl.pallas_call(
        ehr_forward_kernel,
        out_shape=jax.ShapeDtypeStruct((b_pad, N_PAD), jnp.float32),
        grid=grid,
        in_specs=[
            act_spec(K_PAD),                 # event tile        (tile_b, 640) bf16
            act_spec(N_PAD),                 # partialHCC tile   (tile_b, 128) bf16
            res_spec((K_PAD, HIDDEN)),       # w1   (640, 128) bf16
            res_spec((1, HIDDEN)),           # b1   (1, 128)   f32
            res_spec((HIDDEN, HIDDEN)),      # w2   (128, 128) bf16
            res_spec((1, HIDDEN)),           # b2   (1, 128)   f32
            res_spec((HIDDEN, N_PAD)),       # wf_e (128, 128) bf16
            res_spec((N_PAD, N_PAD)),        # wf_h (128, 128) bf16
            res_spec((1, N_PAD)),            # bf   (1, 128)   f32
        ],
        out_specs=act_spec(N_PAD),
        compiler_params=pltpu.CompilerParams(
            dimension_semantics=("parallel",)),
        cost_estimate=pl.CostEstimate(flops=flops, transcendentals=0,
                                      bytes_accessed=bytes_accessed),
    )(ev, hcc, w1, b1, w2, b2, wf_e, wf_h, bf)
    return out[:B, :nclass]


def init_params(key, nclass):
    """Logical (unpadded, f32) parameters matching the PyTorch module."""
    ks = jax.random.split(key, 7)
    scale = 0.02
    w1 = scale * jax.random.normal(ks[0], (EVENT_DIM, HIDDEN), jnp.float32)
    b1 = scale * jax.random.normal(ks[1], (1, HIDDEN), jnp.float32)
    w2 = scale * jax.random.normal(ks[2], (HIDDEN, HIDDEN), jnp.float32)
    b2 = scale * jax.random.normal(ks[3], (1, HIDDEN), jnp.float32)
    # fc weight for embed_size = 128 + nclass, split into the two concat halves
    wf_e = scale * jax.random.normal(ks[4], (HIDDEN, nclass), jnp.float32)
    wf_h = scale * jax.random.normal(ks[5], (nclass, nclass), jnp.float32)
    bf = scale * jax.random.normal(ks[6], (1, nclass), jnp.float32)
    return (w1, b1, w2, b2, wf_e, wf_h, bf)


def prepare_params(params, nclass):
    """One-time pad (K 609->640, N nclass->128) and bf16 cast for the kernel."""
    w1, b1, w2, b2, wf_e, wf_h, bf = params
    w1p = jnp.zeros((K_PAD, HIDDEN), jnp.bfloat16)
    w1p = w1p.at[:EVENT_DIM, :].set(w1.astype(jnp.bfloat16))
    w2p = w2.astype(jnp.bfloat16)
    wf_ep = jnp.zeros((HIDDEN, N_PAD), jnp.bfloat16)
    wf_ep = wf_ep.at[:, :nclass].set(wf_e.astype(jnp.bfloat16))
    wf_hp = jnp.zeros((N_PAD, N_PAD), jnp.bfloat16)
    wf_hp = wf_hp.at[:nclass, :nclass].set(wf_h.astype(jnp.bfloat16))
    bfp = jnp.zeros((1, N_PAD), jnp.float32)
    bfp = bfp.at[:, :nclass].set(bf)
    return (w1p, b1, w2p, b2, wf_ep, wf_hp, bfp)


def ehr_forward_ref(event, partial_hcc, params):
    """Pure-JAX f32 reference (matches the PyTorch forward, use_note=False)."""
    w1, b1, w2, b2, wf_e, wf_h, bf = params
    h1 = jnp.maximum(event @ w1 + b1, 0.0)
    h2 = jnp.maximum(h1 @ w2 + b2, 0.0)
    embeds = jnp.concatenate([h2, partial_hcc], axis=1)
    wf = jnp.concatenate([wf_e, wf_h], axis=0)
    return embeds @ wf + bf


if __name__ == "__main__":
    B = 64
    NCLASS = 16
    TILE_B = 32   # small tile so the test exercises multiple grid steps

    key = jax.random.PRNGKey(0)
    k_event, k_hcc, k_params = jax.random.split(key, 3)

    event = jax.random.normal(k_event, (B, EVENT_DIM), jnp.float32)
    partial_hcc = jax.random.normal(k_hcc, (B, NCLASS), jnp.float32)

    params = init_params(k_params, NCLASS)
    kparams = prepare_params(params, NCLASS)

    out = ehr_forward(event, partial_hcc, kparams, tile_b=TILE_B)
    out = jax.block_until_ready(out)

    ref = ehr_forward_ref(event, partial_hcc, params)
    assert out.shape == (B, NCLASS)
    # bf16 matmul operands with f32 accumulation -> loose-ish tolerance vs f32 ref.
    assert jnp.allclose(out, ref, atol=2e-2, rtol=2e-2), (
        float(jnp.max(jnp.abs(out - ref))))

    print("KERNEL_OK")
</pallas_src>

<mosaic_0001>
module attributes {stable_mosaic.version = 11 : i64} {
  func.func @ehr_forward_kernel(%arg0: i32, %arg1: memref<32x640xbf16, #tpu.memory_space<vmem>>, %arg2: memref<32x128xbf16, #tpu.memory_space<vmem>>, %arg3: memref<640x128xbf16, #tpu.memory_space<vmem>>, %arg4: memref<1x128xf32, #tpu.memory_space<vmem>>, %arg5: memref<128x128xbf16, #tpu.memory_space<vmem>>, %arg6: memref<1x128xf32, #tpu.memory_space<vmem>>, %arg7: memref<128x128xbf16, #tpu.memory_space<vmem>>, %arg8: memref<128x128xbf16, #tpu.memory_space<vmem>>, %arg9: memref<1x128xf32, #tpu.memory_space<vmem>>, %arg10: memref<32x128xf32, #tpu.memory_space<vmem>>) attributes {dimension_semantics = [#tpu.dimension_semantics<parallel>], iteration_bounds = array<i64: 2>, scalar_prefetch = 0 : i64, scratch_operands = 0 : i64, tpu.core_type = #tpu.core_type<tc>, window_params = [{transform_indices = @transform_0, window_bounds = array<i64: 32, 640>}, {transform_indices = @transform_1, window_bounds = array<i64: 32, 128>}, {pipeline_mode = #tpu.pipeline_mode<synchronous>, transform_indices = @transform_2, window_bounds = array<i64: 640, 128>}, {pipeline_mode = #tpu.pipeline_mode<synchronous>, transform_indices = @transform_3, window_bounds = array<i64: 1, 128>}, {pipeline_mode = #tpu.pipeline_mode<synchronous>, transform_indices = @transform_4, window_bounds = array<i64: 128, 128>}, {pipeline_mode = #tpu.pipeline_mode<synchronous>, transform_indices = @transform_5, window_bounds = array<i64: 1, 128>}, {pipeline_mode = #tpu.pipeline_mode<synchronous>, transform_indices = @transform_6, window_bounds = array<i64: 128, 128>}, {pipeline_mode = #tpu.pipeline_mode<synchronous>, transform_indices = @transform_7, window_bounds = array<i64: 128, 128>}, {pipeline_mode = #tpu.pipeline_mode<synchronous>, transform_indices = @transform_8, window_bounds = array<i64: 1, 128>}, {transform_indices = @transform_9, window_bounds = array<i64: 32, 128>}]} {
    %c0 = arith.constant 0 : index
    %c0_0 = arith.constant 0 : index
    %0 = vector.load %arg1[%c0, %c0_0] : memref<32x640xbf16, #tpu.memory_space<vmem>>, vector<32x640xbf16>
    %c0_1 = arith.constant 0 : index
    %c0_2 = arith.constant 0 : index
    %1 = vector.load %arg3[%c0_1, %c0_2] : memref<640x128xbf16, #tpu.memory_space<vmem>>, vector<640x128xbf16>
    %cst = arith.constant dense<0.000000e+00> : vector<32x128xf32>
    %2 = tpu.matmul %0, %1, %cst {dimension_numbers = #tpu.dot_dimension_numbers<[1], [0], [0], [1], [0, 0, 1, 1], [], []>} : vector<32x640xbf16>, vector<640x128xbf16>, vector<32x128xf32> -> vector<32x128xf32>
    %c0_3 = arith.constant 0 : index
    %c0_4 = arith.constant 0 : index
    %3 = vector.load %arg4[%c0_3, %c0_4] : memref<1x128xf32, #tpu.memory_space<vmem>>, vector<1x128xf32>
    %4 = vector.broadcast %3 : vector<1x128xf32> to vector<32x128xf32>
    %5 = arith.addf %2, %4 : vector<32x128xf32>
    %cst_5 = arith.constant 0.000000e+00 : f32
    %6 = vector.broadcast %cst_5 : f32 to vector<32x128xf32>
    %7 = arith.maximumf %5, %6 : vector<32x128xf32>
    %8 = arith.truncf %7 : vector<32x128xf32> to vector<32x128xbf16>
    %c0_6 = arith.constant 0 : index
    %c0_7 = arith.constant 0 : index
    %9 = vector.load %arg5[%c0_6, %c0_7] : memref<128x128xbf16, #tpu.memory_space<vmem>>, vector<128x128xbf16>
    %cst_8 = arith.constant dense<0.000000e+00> : vector<32x128xf32>
    %10 = tpu.matmul %8, %9, %cst_8 {dimension_numbers = #tpu.dot_dimension_numbers<[1], [0], [0], [1], [0, 0, 1, 1], [], []>} : vector<32x128xbf16>, vector<128x128xbf16>, vector<32x128xf32> -> vector<32x128xf32>
    %c0_9 = arith.constant 0 : index
    %c0_10 = arith.constant 0 : index
    %11 = vector.load %arg6[%c0_9, %c0_10] : memref<1x128xf32, #tpu.memory_space<vmem>>, vector<1x128xf32>
    %12 = vector.broadcast %11 : vector<1x128xf32> to vector<32x128xf32>
    %13 = arith.addf %10, %12 : vector<32x128xf32>
    %cst_11 = arith.constant 0.000000e+00 : f32
    %14 = vector.broadcast %cst_11 : f32 to vector<32x128xf32>
    %15 = arith.maximumf %13, %14 : vector<32x128xf32>
    %16 = arith.truncf %15 : vector<32x128xf32> to vector<32x128xbf16>
    %c0_12 = arith.constant 0 : index
    %c0_13 = arith.constant 0 : index
    %17 = vector.load %arg7[%c0_12, %c0_13] : memref<128x128xbf16, #tpu.memory_space<vmem>>, vector<128x128xbf16>
    %cst_14 = arith.constant dense<0.000000e+00> : vector<32x128xf32>
    %18 = tpu.matmul %16, %17, %cst_14 {dimension_numbers = #tpu.dot_dimension_numbers<[1], [0], [0], [1], [0, 0, 1, 1], [], []>} : vector<32x128xbf16>, vector<128x128xbf16>, vector<32x128xf32> -> vector<32x128xf32>
    %c0_15 = arith.constant 0 : index
    %c0_16 = arith.constant 0 : index
    %19 = vector.load %arg2[%c0_15, %c0_16] : memref<32x128xbf16, #tpu.memory_space<vmem>>, vector<32x128xbf16>
    %c0_17 = arith.constant 0 : index
    %c0_18 = arith.constant 0 : index
    %20 = vector.load %arg8[%c0_17, %c0_18] : memref<128x128xbf16, #tpu.memory_space<vmem>>, vector<128x128xbf16>
    %cst_19 = arith.constant dense<0.000000e+00> : vector<32x128xf32>
    %21 = tpu.matmul %19, %20, %cst_19 {dimension_numbers = #tpu.dot_dimension_numbers<[1], [0], [0], [1], [0, 0, 1, 1], [], []>} : vector<32x128xbf16>, vector<128x128xbf16>, vector<32x128xf32> -> vector<32x128xf32>
    %22 = arith.addf %18, %21 : vector<32x128xf32>
    %c0_20 = arith.constant 0 : index
    %c0_21 = arith.constant 0 : index
    %23 = vector.load %arg9[%c0_20, %c0_21] : memref<1x128xf32, #tpu.memory_space<vmem>>, vector<1x128xf32>
    %24 = vector.broadcast %23 : vector<1x128xf32> to vector<32x128xf32>
    %25 = arith.addf %22, %24 : vector<32x128xf32>
    %c0_22 = arith.constant 0 : index
    %c0_23 = arith.constant 0 : index
    %26 = vector.load %arg10[%c0_22, %c0_23] : memref<32x128xf32, #tpu.memory_space<vmem>>, vector<32x128xf32>
    tpu.vector_store %arg10[%c0_22, %c0_23], %25 {strides = array<i32>} : memref<32x128xf32, #tpu.memory_space<vmem>>, vector<32x128xf32>,
    return
  }
  func.func @transform_0(%arg0: i32) -> (i32, i32) {
    %c0_i32 = arith.constant 0 : i32
    %c0_i32_0 = arith.constant 0 : i32
    return %arg0, %c0_i32 : i32, i32
  }
  func.func @transform_1(%arg0: i32) -> (i32, i32) {
    %c0_i32 = arith.constant 0 : i32
    %c0_i32_0 = arith.constant 0 : i32
    return %arg0, %c0_i32 : i32, i32
  }
  func.func @transform_2(%arg0: i32) -> (i32, i32) {
    %c0_i32 = arith.constant 0 : i32
    %c0_i32_0 = arith.constant 0 : i32
    %c0_i32_1 = arith.constant 0 : i32
    return %c0_i32, %c0_i32_0 : i32, i32
  }
  func.func @transform_3(%arg0: i32) -> (i32, i32) {
    %c0_i32 = arith.constant 0 : i32
    %c0_i32_0 = arith.constant 0 : i32
    %c0_i32_1 = arith.constant 0 : i32
    return %c0_i32, %c0_i32_0 : i32, i32
  }
  func.func @transform_4(%arg0: i32) -> (i32, i32) {
    %c0_i32 = arith.constant 0 : i32
    %c0_i32_0 = arith.constant 0 : i32
    %c0_i32_1 = arith.constant 0 : i32
    return %c0_i32, %c0_i32_0 : i32, i32
  }
  func.func @transform_5(%arg0: i32) -> (i32, i32) {
    %c0_i32 = arith.constant 0 : i32
    %c0_i32_0 = arith.constant 0 : i32
    %c0_i32_1 = arith.constant 0 : i32
    return %c0_i32, %c0_i32_0 : i32, i32
  }
  func.func @transform_6(%arg0: i32) -> (i32, i32) {
    %c0_i32 = arith.constant 0 : i32
    %c0_i32_0 = arith.constant 0 : i32
    %c0_i32_1 = arith.constant 0 : i32
    return %c0_i32, %c0_i32_0 : i32, i32
  }
  func.func @transform_7(%arg0: i32) -> (i32, i32) {
    %c0_i32 = arith.constant 0 : i32
    %c0_i32_0 = arith.constant 0 : i32
    %c0_i32_1 = arith.constant 0 : i32
    return %c0_i32, %c0_i32_0 : i32, i32
  }
  func.func @transform_8(%arg0: i32) -> (i32, i32) {
    %c0_i32 = arith.constant 0 : i32
    %c0_i32_0 = arith.constant 0 : i32
    %c0_i32_1 = arith.constant 0 : i32
    return %c0_i32, %c0_i32_0 : i32, i32
  }
  func.func @transform_9(%arg0: i32) -> (i32, i32) {
    %c0_i32 = arith.constant 0 : i32
    %c0_i32_0 = arith.constant 0 : i32
    return %arg0, %c0_i32 : i32, i32
  }
}

</mosaic_0001>

<llo_original>
// kernel: ehr_forward.1
$region0: #{ehr_forward.1}
  #allocation0 [shape = 'u32[]', space=smem, size = 0x4, offset = 0x4, fixed_abs, tag = 'smem constant byte address 0x4 - core index']
  #allocation1 [shape = 'u32[144,128]{1,0:T(1,128)}', space=vmem, size = 0x12000, scoped, tag = 'internal scratch']
  %s0 = inlined_call_operand.vmem [shape: bf16[64,640], index: 0, kind: input, shape index: {}]
  %s1 = inlined_call_operand.vmem [shape: bf16[64,128], index: 1, kind: input, shape index: {}]
  %s2 = inlined_call_operand.vmem [shape: bf16[640,128], index: 2, kind: input, shape index: {}]
  %s3 = inlined_call_operand.vmem [shape: f32[1,128], index: 3, kind: input, shape index: {}]
  %s4 = inlined_call_operand.vmem [shape: bf16[128,128], index: 4, kind: input, shape index: {}]
  %s5 = inlined_call_operand.vmem [shape: f32[1,128], index: 5, kind: input, shape index: {}]
  %s6 = inlined_call_operand.vmem [shape: bf16[128,128], index: 6, kind: input, shape index: {}]
  %s7 = inlined_call_operand.vmem [shape: bf16[128,128], index: 7, kind: input, shape index: {}]
  %s8 = inlined_call_operand.vmem [shape: f32[1,128], index: 8, kind: input, shape index: {}]
  %s9 = inlined_call_operand.vmem [shape: f32[64,128], index: 9, kind: output, shape index: {}]
  %s10 = sld [smem:[#allocation0]]
  $region69: #{ehr_forward.1} parent=0
    _
  %s12 = ssub.s32 1, %s10
  %s13 = scalar_select 0, %s12, %s10
  loop: start=0, step=1, limit=4
  $region2: #{ehr_forward.1} parent=0 // loop_pre_header
    _
  $region3: #{ehr_forward.1} parent=0 // loop_header
    %s15 = sphi 0, %s19
    %p16 = scmp.ge.s32.totalorder %s15, 4
    %s25 = sphi 0, %s27
    %s28 = sphi 0, %s25
    %s29 = sphi 0, %s28
    %s45 = sphi 0, %s29
    %s51 = sphi 0, %s53
    %s54 = sphi 0, %s51
    %s55 = sphi 0, %s54
    %s71 = sphi 0, %s55
    %s75 = sphi 0, %s75
    %s77 = sphi 0, %s75
    %s78 = sphi 0, %s77
    %s92 = sphi 0, %s78
    %s96 = sphi 0, %s96
    %s98 = sphi 0, %s96
    %s99 = sphi 0, %s98
    %s113 = sphi 0, %s99
    %s117 = sphi 0, %s117
    %s119 = sphi 0, %s117
    %s120 = sphi 0, %s119
    %s134 = sphi 0, %s120
    %s138 = sphi 0, %s138
    %s140 = sphi 0, %s138
    %s141 = sphi 0, %s140
    %s155 = sphi 0, %s141
    %s159 = sphi 0, %s159
    %s161 = sphi 0, %s159
    %s162 = sphi 0, %s161
    %s176 = sphi 0, %s162
    %s180 = sphi 0, %s180
    %s182 = sphi 0, %s180
    %s183 = sphi 0, %s182
    %s197 = sphi 0, %s183
    %s201 = sphi 0, %s201
    %s203 = sphi 0, %s201
    %s204 = sphi 0, %s203
    %s218 = sphi 0, %s204
    %s224 = sphi 0, %s226
    %s227 = sphi 0, %s224
    %s228 = sphi 0, %s227
    %s244 = sphi 0, %s228
  $region4: #{ehr_forward.1} parent=0 // loop_header_branch
    %18 = sbr.rel (%p16) target = $region8
  $region5: #{ehr_forward.1} parent=0 // loop_body
    %s20 = ssub.s32 %s15, 1
    %s21 = ssub.s32 %s15, 2
    %s22 = sadd.s32 %s15, 1
    %s23 = ssub.s32 %s15, %s22
    %p24 = scmp.eq.s32.totalorder %s23, 0
    %s26 = sadd.s32 %s25, 1
    %s27 = scalar_select %p24, %s25, %s26
    %p30 = pneg %p24
    %p31 = scmp.eq.s32.totalorder %s15, 1
    %p32 = por %p30, %p31
    %p33 = scmp.ne.s32.totalorder %s25, %s28
    %p34 = scmp.eq.s32.totalorder %s15, 0
    %p35 = por %p33, %p34
    %p36 = scmp.ne.s32.totalorder %s25, %s28
    %p37 = scmp.eq.s32.totalorder %s20, 1
    %p38 = por %p36, %p37
    %p39 = scmp.ne.s32.totalorder %s28, %s29
    %p40 = scmp.eq.s32.totalorder %s20, 0
    %p41 = por %p39, %p40
    %p42 = scmp.ne.s32.totalorder %s28, %s29
    %p43 = scmp.eq.s32.totalorder %s21, 1
    %p44 = por %p42, %p43
    %p46 = scmp.ne.s32.totalorder %s29, %s45
    %p47 = scmp.eq.s32.totalorder %s21, 0
    %p48 = por %p46, %p47
    %s49 = ssub.s32 %s15, %s22
    %p50 = scmp.eq.s32.totalorder %s49, 0
    %s52 = sadd.s32 %s51, 1
    %s53 = scalar_select %p50, %s51, %s52
    %p56 = pneg %p50
    %p57 = scmp.eq.s32.totalorder %s15, 1
    %p58 = por %p56, %p57
    %p59 = scmp.ne.s32.totalorder %s51, %s54
    %p60 = scmp.eq.s32.totalorder %s15, 0
    %p61 = por %p59, %p60
    %p62 = scmp.ne.s32.totalorder %s51, %s54
    %p63 = scmp.eq.s32.totalorder %s20, 1
    %p64 = por %p62, %p63
    %p65 = scmp.ne.s32.totalorder %s54, %s55
    %p66 = scmp.eq.s32.totalorder %s20, 0
    %p67 = por %p65, %p66
    %p68 = scmp.ne.s32.totalorder %s54, %s55
    %p69 = scmp.eq.s32.totalorder %s21, 1
    %p70 = por %p68, %p69
    %p72 = scmp.ne.s32.totalorder %s55, %s71
    %p73 = scmp.eq.s32.totalorder %s21, 0
    %p74 = por %p72, %p73
    %s76 = sadd.s32 %s75, 1
    %p79 = scmp.eq.s32.totalorder %s15, 1
    %p80 = scmp.ne.s32.totalorder %s75, %s77
    %p81 = scmp.eq.s32.totalorder %s15, 0
    %p82 = por %p80, %p81
    %p83 = scmp.ne.s32.totalorder %s75, %s77
    %p84 = scmp.eq.s32.totalorder %s20, 1
    %p85 = por %p83, %p84
    %p86 = scmp.ne.s32.totalorder %s77, %s78
    %p87 = scmp.eq.s32.totalorder %s20, 0
    %p88 = por %p86, %p87
    %p89 = scmp.ne.s32.totalorder %s77, %s78
    %p90 = scmp.eq.s32.totalorder %s21, 1
    %p91 = por %p89, %p90
    %p93 = scmp.ne.s32.totalorder %s78, %s92
    %p94 = scmp.eq.s32.totalorder %s21, 0
    %p95 = por %p93, %p94
    %s97 = sadd.s32 %s96, 1
    %p100 = scmp.eq.s32.totalorder %s15, 1
    %p101 = scmp.ne.s32.totalorder %s96, %s98
    %p102 = scmp.eq.s32.totalorder %s15, 0
    %p103 = por %p101, %p102
    %p104 = scmp.ne.s32.totalorder %s96, %s98
    %p105 = scmp.eq.s32.totalorder %s20, 1
    %p106 = por %p104, %p105
    %p107 = scmp.ne.s32.totalorder %s98, %s99
    %p108 = scmp.eq.s32.totalorder %s20, 0
    %p109 = por %p107, %p108
    %p110 = scmp.ne.s32.totalorder %s98, %s99
    %p111 = scmp.eq.s32.totalorder %s21, 1
    %p112 = por %p110, %p111
    %p114 = scmp.ne.s32.totalorder %s99, %s113
    %p115 = scmp.eq.s32.totalorder %s21, 0
    %p116 = por %p114, %p115
    %s118 = sadd.s32 %s117, 1
    %p121 = scmp.eq.s32.totalorder %s15, 1
    %p122 = scmp.ne.s32.totalorder %s117, %s119
    %p123 = scmp.eq.s32.totalorder %s15, 0
    %p124 = por %p122, %p123
    %p125 = scmp.ne.s32.totalorder %s117, %s119
    %p126 = scmp.eq.s32.totalorder %s20, 1
    %p127 = por %p125, %p126
    %p128 = scmp.ne.s32.totalorder %s119, %s120
    %p129 = scmp.eq.s32.totalorder %s20, 0
    %p130 = por %p128, %p129
    %p131 = scmp.ne.s32.totalorder %s119, %s120
    %p132 = scmp.eq.s32.totalorder %s21, 1
    %p133 = por %p131, %p132
    %p135 = scmp.ne.s32.totalorder %s120, %s134
    %p136 = scmp.eq.s32.totalorder %s21, 0
    %p137 = por %p135, %p136
    %s139 = sadd.s32 %s138, 1
    %p142 = scmp.eq.s32.totalorder %s15, 1
    %p143 = scmp.ne.s32.totalorder %s138, %s140
    %p144 = scmp.eq.s32.totalorder %s15, 0
    %p145 = por %p143, %p144
    %p146 = scmp.ne.s32.totalorder %s138, %s140
    %p147 = scmp.eq.s32.totalorder %s20, 1
    %p148 = por %p146, %p147
    %p149 = scmp.ne.s32.totalorder %s140, %s141
    %p150 = scmp.eq.s32.totalorder %s20, 0
    %p151 = por %p149, %p150
    %p152 = scmp.ne.s32.totalorder %s140, %s141
    %p153 = scmp.eq.s32.totalorder %s21, 1
    %p154 = por %p152, %p153
    %p156 = scmp.ne.s32.totalorder %s141, %s155
    %p157 = scmp.eq.s32.totalorder %s21, 0
    %p158 = por %p156, %p157
    %s160 = sadd.s32 %s159, 1
    %p163 = scmp.eq.s32.totalorder %s15, 1
    %p164 = scmp.ne.s32.totalorder %s159, %s161
    %p165 = scmp.eq.s32.totalorder %s15, 0
    %p166 = por %p164, %p165
    %p167 = scmp.ne.s32.totalorder %s159, %s161
    %p168 = scmp.eq.s32.totalorder %s20, 1
    %p169 = por %p167, %p168
    %p170 = scmp.ne.s32.totalorder %s161, %s162
    %p171 = scmp.eq.s32.totalorder %s20, 0
    %p172 = por %p170, %p171
    %p173 = scmp.ne.s32.totalorder %s161, %s162
    %p174 = scmp.eq.s32.totalorder %s21, 1
    %p175 = por %p173, %p174
    %p177 = scmp.ne.s32.totalorder %s162, %s176
    %p178 = scmp.eq.s32.totalorder %s21, 0
    %p179 = por %p177, %p178
    %s181 = sadd.s32 %s180, 1
    %p184 = scmp.eq.s32.totalorder %s15, 1
    %p185 = scmp.ne.s32.totalorder %s180, %s182
    %p186 = scmp.eq.s32.totalorder %s15, 0
    %p187 = por %p185, %p186
    %p188 = scmp.ne.s32.totalorder %s180, %s182
    %p189 = scmp.eq.s32.totalorder %s20, 1
    %p190 = por %p188, %p189
    %p191 = scmp.ne.s32.totalorder %s182, %s183
    %p192 = scmp.eq.s32.totalorder %s20, 0
    %p193 = por %p191, %p192
    %p194 = scmp.ne.s32.totalorder %s182, %s183
    %p195 = scmp.eq.s32.totalorder %s21, 1
    %p196 = por %p194, %p195
    %p198 = scmp.ne.s32.totalorder %s183, %s197
    %p199 = scmp.eq.s32.totalorder %s21, 0
    %p200 = por %p198, %p199
    %s202 = sadd.s32 %s201, 1
    %p205 = scmp.eq.s32.totalorder %s15, 1
    %p206 = scmp.ne.s32.totalorder %s201, %s203
    %p207 = scmp.eq.s32.totalorder %s15, 0
    %p208 = por %p206, %p207
    %p209 = scmp.ne.s32.totalorder %s201, %s203
    %p210 = scmp.eq.s32.totalorder %s20, 1
    %p211 = por %p209, %p210
    %p212 = scmp.ne.s32.totalorder %s203, %s204
    %p213 = scmp.eq.s32.totalorder %s20, 0
    %p214 = por %p212, %p213
    %p215 = scmp.ne.s32.totalorder %s203, %s204
    %p216 = scmp.eq.s32.totalorder %s21, 1
    %p217 = por %p215, %p216
    %p219 = scmp.ne.s32.totalorder %s204, %s218
    %p220 = scmp.eq.s32.totalorder %s21, 0
    %p221 = por %p219, %p220
    %s222 = ssub.s32 %s15, %s22
    %p223 = scmp.eq.s32.totalorder %s222, 0
    %s225 = sadd.s32 %s224, 1
    %s226 = scalar_select %p223, %s224, %s225
    %p229 = pneg %p223
    %p230 = scmp.eq.s32.totalorder %s15, 1
    %p231 = por %p229, %p230
    %p232 = scmp.ne.s32.totalorder %s224, %s227
    %p233 = scmp.eq.s32.totalorder %s15, 0
    %p234 = por %p232, %p233
    %p235 = scmp.ne.s32.totalorder %s224, %s227
    %p236 = scmp.eq.s32.totalorder %s20, 1
    %p237 = por %p235, %p236
    %p238 = scmp.ne.s32.totalorder %s227, %s228
    %p239 = scmp.eq.s32.totalorder %s20, 0
    %p240 = por %p238, %p239
    %p241 = scmp.ne.s32.totalorder %s227, %s228
    %p242 = scmp.eq.s32.totalorder %s21, 1
    %p243 = por %p241, %p242
    %p245 = scmp.ne.s32.totalorder %s228, %s244
    %p246 = scmp.eq.s32.totalorder %s21, 0
    %p247 = por %p245, %p246
    %p248 = scmp.le.s32.totalorder 1, %s15
    %p249 = scmp.lt.s32.totalorder %s15, 3
    %p250 = pnand %p248, %p249
    %p251 = pneg %p250
    // Predicated region
    $region9: #{ehr_forward.1} parent=5 // pred_check
      _
    $region10: #{ehr_forward.1} parent=5 // pred_check_branch
      %253 = sbr.rel (%p250) target = $region12
    $region11: #{ehr_forward.1} parent=5 // pred_region
      %s254 = ssub.s32 %s15, 1
      // Predicated region
      $region13: #{ehr_forward.1} parent=11 // pred_check
        %p255 = pneg %p88
      $region14: #{ehr_forward.1} parent=11 // pred_check_branch
        %257 = sbr.rel (%p255) target = $region16
      $region15: #{ehr_forward.1} parent=11 // pred_region
        _
      $region16: #{ehr_forward.1} parent=11 // pred_fallthru
        _
      // Predicated region
      $region17: #{ehr_forward.1} parent=11 // pred_check
        %p258 = pneg %p109
      $region18: #{ehr_forward.1} parent=11 // pred_check_branch
        %260 = sbr.rel (%p258) target = $region20
      $region19: #{ehr_forward.1} parent=11 // pred_region
        _
      $region20: #{ehr_forward.1} parent=11 // pred_fallthru
        _
      // Predicated region
      $region21: #{ehr_forward.1} parent=11 // pred_check
        %p261 = pneg %p130
      $region22: #{ehr_forward.1} parent=11 // pred_check_branch
        %263 = sbr.rel (%p261) target = $region24
      $region23: #{ehr_forward.1} parent=11 // pred_region
        _
      $region24: #{ehr_forward.1} parent=11 // pred_fallthru
        _
      // Predicated region
      $region25: #{ehr_forward.1} parent=11 // pred_check
        %p264 = pneg %p151
      $region26: #{ehr_forward.1} parent=11 // pred_check_branch
        %266 = sbr.rel (%p264) target = $region28
      $region27: #{ehr_forward.1} parent=11 // pred_region
        _
      $region28: #{ehr_forward.1} parent=11 // pred_fallthru
        _
      // Predicated region
      $region29: #{ehr_forward.1} parent=11 // pred_check
        %p267 = pneg %p172
      $region30: #{ehr_forward.1} parent=11 // pred_check_branch
        %269 = sbr.rel (%p267) target = $region32
      $region31: #{ehr_forward.1} parent=11 // pred_region
        _
      $region32: #{ehr_forward.1} parent=11 // pred_fallthru
        _
      // Predicated region
      $region33: #{ehr_forward.1} parent=11 // pred_check
        %p270 = pneg %p193
      $region34: #{ehr_forward.1} parent=11 // pred_check_branch
        %272 = sbr.rel (%p270) target = $region36
      $region35: #{ehr_forward.1} parent=11 // pred_region
        _
      $region36: #{ehr_forward.1} parent=11 // pred_fallthru
        _
      // Predicated region
      $region37: #{ehr_forward.1} parent=11 // pred_check
        %p273 = pneg %p214
      $region38: #{ehr_forward.1} parent=11 // pred_check_branch
        %275 = sbr.rel (%p273) target = $region40
      $region39: #{ehr_forward.1} parent=11 // pred_region
        _
      $region40: #{ehr_forward.1} parent=11 // pred_fallthru
        _
    $region12: #{ehr_forward.1} parent=5 // pred_fallthru
      _
    %p276 = scmp.lt.s32.totalorder %s15, 2
    // Predicated region
    $region41: #{ehr_forward.1} parent=5 // pred_check
      %p277 = pneg %p276
    $region42: #{ehr_forward.1} parent=5 // pred_check_branch
      %279 = sbr.rel (%p277) target = $region44
    $region43: #{ehr_forward.1} parent=5 // pred_region
      // Predicated region
      $region45: #{ehr_forward.1} parent=43 // pred_check
        %p280 = pneg %p35
      $region46: #{ehr_forward.1} parent=43 // pred_check_branch
        %282 = sbr.rel (%p280) target = $region48
      $region47: #{ehr_forward.1} parent=43 // pred_region
        %s283 = smul.u32 4, %s15
        %p284 = scmp.lt.s32.totalorder %s283, 7
        %s285 = scalar_select %p284, %s283, 7
        %s286 = smul.addr %s285, 5
        %s287 = smul.addr %s286, 4
        %s288 = scalar_lea.vmem %s0, %s287
        %s289 = smul.u32 4, %s15
      $region48: #{ehr_forward.1} parent=43 // pred_fallthru
        _
      // Predicated region
      $region49: #{ehr_forward.1} parent=43 // pred_check
        %p290 = pneg %p61
      $region50: #{ehr_forward.1} parent=43 // pred_check_branch
        %292 = sbr.rel (%p290) target = $region52
      $region51: #{ehr_forward.1} parent=43 // pred_region
        %s293 = smul.u32 4, %s15
        %p294 = scmp.lt.s32.totalorder %s293, 7
        %s295 = scalar_select %p294, %s293, 7
        %s296 = smul.addr %s295, 4
        %s297 = scalar_lea.vmem %s1, %s296
        %s298 = smul.u32 4, %s15
      $region52: #{ehr_forward.1} parent=43 // pred_fallthru
        _
    $region44: #{ehr_forward.1} parent=5 // pred_fallthru
      _
    %p299 = scmp.le.s32.totalorder 1, %s15
    %p300 = scmp.lt.s32.totalorder %s15, 3
    %p301 = pnand %p299, %p300
    %p302 = pneg %p301
    // Predicated region
    $region53: #{ehr_forward.1} parent=5 // pred_check
      _
    $region54: #{ehr_forward.1} parent=5 // pred_check_branch
      %304 = sbr.rel (%p301) target = $region56
    $region55: #{ehr_forward.1} parent=5 // pred_region
      %s305 = ssub.s32 %s15, 1
      %s306 = smul.u32 4, %s20
      %p307 = scmp.lt.s32.totalorder %s306, 7
      %s308 = scalar_select %p307, %s306, 7
      %s309 = smul.addr %s308, 5
      %s310 = smul.addr %s309, 4
      %s311 = scalar_lea.vmem %s0, %s310
      %p312 = pneg %p41
      %p313 = pneg %p38
      %s314 = smul.u32 4, %s20
      %p315 = scmp.lt.s32.totalorder %s314, 7
      %s316 = scalar_select %p315, %s314, 7
      %s317 = smul.addr %s316, 4
      %s318 = scalar_lea.vmem %s1, %s317
      %p319 = pneg %p67
      %p320 = pneg %p64
      %p321 = pneg %p88
      %p322 = pneg %p85
      %p323 = pneg %p109
      %p324 = pneg %p106
      %p325 = pneg %p130
      %p326 = pneg %p127
      %p327 = pneg %p151
      %p328 = pneg %p148
      %p329 = pneg %p172
      %p330 = pneg %p169
      %p331 = pneg %p193
      %p332 = pneg %p190
      %p333 = pneg %p214
      %p334 = pneg %p211
      %p335 = pneg %p240
      %p336 = pneg %p237
      %s337 = smul.u32 4, %s20
      %p338 = scmp.lt.s32.totalorder %s337, 7
      %s339 = scalar_select %p338, %s337, 7
      %s340 = smul.addr %s339, 8
      %s341 = scalar_lea.vmem %s9, %s340
      %s342 = smul.u32 4, %s20
      %p343 = scmp.lt.s32.totalorder %s342, 7
      %s344 = scalar_select %p343, %s342, 7
      %s345 = smul.addr %s344, 5
      %s346 = smul.addr %s345, 4
      %s347 = scalar_lea.vmem %s0, %s346
      %s348 = smul.u32 4, %s20
      %s349 = smul.u32 4, %s20
      %p350 = scmp.lt.s32.totalorder %s349, 7
      %s351 = scalar_select %p350, %s349, 7
      %s352 = smul.addr %s351, 4
      %s353 = scalar_lea.vmem %s1, %s352
      %s354 = smul.u32 4, %s20
      %s355 = smul.u32 4, %s20
      %p356 = scmp.lt.s32.totalorder %s355, 7
      %s357 = scalar_select %p356, %s355, 7
      %s358 = smul.addr %s357, 8
      %s359 = scalar_lea.vmem %s9, %s358
      %s360 = smul.u32 4, %s20
      %v362 = vld [vmem:[%s347] sm:$0xff]
      %v363 = vld [vmem:[%s347 + $0x8] sm:$0xff]
      %v364 = vld [vmem:[%s347 + $0x10] sm:$0xf]
      %v365 = vld [vmem:[%s347 + $0x14] sm:$0xff]
      %v366 = vld [vmem:[%s347 + $0x1c] sm:$0xff]
      %v367 = vld [vmem:[%s347 + $0x24] sm:$0xf]
      %v368 = vld [vmem:[%s347 + $0x28] sm:$0xff]
      %v369 = vld [vmem:[%s347 + $0x30] sm:$0xff]
      %v370 = vld [vmem:[%s347 + $0x38] sm:$0xf]
      %v371 = vld [vmem:[%s347 + $0x3c] sm:$0xff]
      %v372 = vld [vmem:[%s347 + $0x44] sm:$0xff]
      %v373 = vld [vmem:[%s347 + $0x4c] sm:$0xf]
      %v374 = vld [vmem:[%s2] sm:$0xf]
      %v375 = vld [vmem:[%s2 + $0x4] sm:$0xf]
      %v376 = vld [vmem:[%s2 + $0x8] sm:$0xf]
      %v377 = vld [vmem:[%s2 + $0xc] sm:$0xf]
      %v378 = vld [vmem:[%s2 + $0x10] sm:$0xf]
      %v379 = vld [vmem:[%s2 + $0x14] sm:$0xf]
      %v380 = vld [vmem:[%s2 + $0x18] sm:$0xf]
      %v381 = vld [vmem:[%s2 + $0x1c] sm:$0xf]
      %v382 = vld [vmem:[%s2 + $0x20] sm:$0xf]
      %v383 = vld [vmem:[%s2 + $0x24] sm:$0xf]
      %v384 = vld [vmem:[%s2 + $0x28] sm:$0xf]
      %v385 = vld [vmem:[%s2 + $0x2c] sm:$0xf]
      %v386 = vld [vmem:[%s2 + $0x30] sm:$0xf]
      %v387 = vld [vmem:[%s2 + $0x34] sm:$0xf]
      %v388 = vld [vmem:[%s2 + $0x38] sm:$0xf]
      %v389 = vld [vmem:[%s2 + $0x3c] sm:$0xf]
      %v390 = vld [vmem:[%s2 + $0x40] sm:$0xf]
      %v391 = vld [vmem:[%s2 + $0x44] sm:$0xf]
      %v392 = vld [vmem:[%s2 + $0x48] sm:$0xf]
      %v393 = vld [vmem:[%s2 + $0x4c] sm:$0xf]
      %v394 = vld [vmem:[%s2 + $0x50] sm:$0xf]
      %v395 = vld [vmem:[%s2 + $0x54] sm:$0xf]
      %v396 = vld [vmem:[%s2 + $0x58] sm:$0xf]
      %v397 = vld [vmem:[%s2 + $0x5c] sm:$0xf]
      %v398 = vld [vmem:[%s2 + $0x60] sm:$0xf]
      %v399 = vld [vmem:[%s2 + $0x64] sm:$0xf]
      %v400 = vld [vmem:[%s2 + $0x68] sm:$0xf]
      %v401 = vld [vmem:[%s2 + $0x6c] sm:$0xf]
      %v402 = vld [vmem:[%s2 + $0x70] sm:$0xf]
      %v403 = vld [vmem:[%s2 + $0x74] sm:$0xf]
      %v404 = vld [vmem:[%s2 + $0x78] sm:$0xf]
      %v405 = vld [vmem:[%s2 + $0x7c] sm:$0xf]
      %v406 = vld [vmem:[%s2 + $0x80] sm:$0xf]
      %v407 = vld [vmem:[%s2 + $0x84] sm:$0xf]
      %v408 = vld [vmem:[%s2 + $0x88] sm:$0xf]
      %v409 = vld [vmem:[%s2 + $0x8c] sm:$0xf]
      %v410 = vld [vmem:[%s2 + $0x90] sm:$0xf]
      %v411 = vld [vmem:[%s2 + $0x94] sm:$0xf]
      %v412 = vld [vmem:[%s2 + $0x98] sm:$0xf]
      %v413 = vld [vmem:[%s2 + $0x9c] sm:$0xf]
      %v414 = vld [vmem:[%s2 + $0xa0] sm:$0xf]
      %v415 = vld [vmem:[%s2 + $0xa4] sm:$0xf]
      %v416 = vld [vmem:[%s2 + $0xa8] sm:$0xf]
      %v417 = vld [vmem:[%s2 + $0xac] sm:$0xf]
      %v418 = vld [vmem:[%s2 + $0xb0] sm:$0xf]
      %v419 = vld [vmem:[%s2 + $0xb4] sm:$0xf]
      %v420 = vld [vmem:[%s2 + $0xb8] sm:$0xf]
      %v421 = vld [vmem:[%s2 + $0xbc] sm:$0xf]
      %v422 = vld [vmem:[%s2 + $0xc0] sm:$0xf]
      %v423 = vld [vmem:[%s2 + $0xc4] sm:$0xf]
      %v424 = vld [vmem:[%s2 + $0xc8] sm:$0xf]
      %v425 = vld [vmem:[%s2 + $0xcc] sm:$0xf]
      %v426 = vld [vmem:[%s2 + $0xd0] sm:$0xf]
      %v427 = vld [vmem:[%s2 + $0xd4] sm:$0xf]
      %v428 = vld [vmem:[%s2 + $0xd8] sm:$0xf]
      %v429 = vld [vmem:[%s2 + $0xdc] sm:$0xf]
      %v430 = vld [vmem:[%s2 + $0xe0] sm:$0xf]
      %v431 = vld [vmem:[%s2 + $0xe4] sm:$0xf]
      %v432 = vld [vmem:[%s2 + $0xe8] sm:$0xf]
      %v433 = vld [vmem:[%s2 + $0xec] sm:$0xf]
      %v434 = vld [vmem:[%s2 + $0xf0] sm:$0xf]
      %v435 = vld [vmem:[%s2 + $0xf4] sm:$0xf]
      %v436 = vld [vmem:[%s2 + $0xf8] sm:$0xf]
      %v437 = vld [vmem:[%s2 + $0xfc] sm:$0xf]
      %v438 = vld [vmem:[%s2 + $0x100] sm:$0xf]
      %v439 = vld [vmem:[%s2 + $0x104] sm:$0xf]
      %v440 = vld [vmem:[%s2 + $0x108] sm:$0xf]
      %v441 = vld [vmem:[%s2 + $0x10c] sm:$0xf]
      %v442 = vld [vmem:[%s2 + $0x110] sm:$0xf]
      %v443 = vld [vmem:[%s2 + $0x114] sm:$0xf]
      %v444 = vld [vmem:[%s2 + $0x118] sm:$0xf]
      %v445 = vld [vmem:[%s2 + $0x11c] sm:$0xf]
      %v446 = vld [vmem:[%s2 + $0x120] sm:$0xf]
      %v447 = vld [vmem:[%s2 + $0x124] sm:$0xf]
      %v448 = vld [vmem:[%s2 + $0x128] sm:$0xf]
      %v449 = vld [vmem:[%s2 + $0x12c] sm:$0xf]
      %v450 = vld [vmem:[%s2 + $0x130] sm:$0xf]
      %v451 = vld [vmem:[%s2 + $0x134] sm:$0xf]
      %v452 = vld [vmem:[%s2 + $0x138] sm:$0xf]
      %v453 = vld [vmem:[%s2 + $0x13c] sm:$0xf]
      %v454 = vld [vmem:[%s3] sm:$0x1]
      %v456 = vlaneseq
      %v457 = vshrl.u32 %v456, 7
      %v458 = vsub.s32 0, %v457
      %v459 = vrot.slane %v454, %v458
      %v473 = vunpack.c.l.b16 %v362
      %v474 = vunpack.c.h.b16 %v362
      %v475 = vunpack.c.l.b16 %v363
      %v476 = vunpack.c.h.b16 %v363
      %v477 = vunpack.c.l.b16 %v364
      %v478 = vunpack.c.l.b16 %v365
      %v479 = vunpack.c.h.b16 %v365
      %v480 = vunpack.c.l.b16 %v366
      %v481 = vunpack.c.h.b16 %v366
      %v482 = vunpack.c.l.b16 %v367
      %v483 = vunpack.c.l.b16 %v368
      %v484 = vunpack.c.h.b16 %v368
      %v485 = vunpack.c.l.b16 %v369
      %v486 = vunpack.c.h.b16 %v369
      %v487 = vunpack.c.l.b16 %v370
      %v488 = vunpack.c.l.b16 %v371
      %v489 = vunpack.c.h.b16 %v371
      %v490 = vunpack.c.l.b16 %v372
      %v491 = vunpack.c.h.b16 %v372
      %v492 = vunpack.c.l.b16 %v373
      %v493 = vpack.c.b16 %v478, %v473
      %v494 = vpack.c.b16 %v479, %v474
      %v495 = vpack.c.b16 %v480, %v475
      %v496 = vpack.c.b16 %v481, %v476
      %v497 = vpack.c.b16 %v482, %v477
      %v498 = vpack.c.b16 %v488, %v483
      %v499 = vpack.c.b16 %v489, %v484
      %v500 = vpack.c.b16 %v490, %v485
      %v501 = vpack.c.b16 %v491, %v486
      %v502 = vpack.c.b16 %v492, %v487
      %v593 = vunpack.c.l.b16 %v374
      %v594 = vunpack.c.l.b16 %v375
      %v595 = vunpack.c.l.b16 %v376
      %v596 = vunpack.c.l.b16 %v377
      %v597 = vunpack.c.l.b16 %v378
      %v598 = vunpack.c.l.b16 %v379
      %v599 = vunpack.c.l.b16 %v380
      %v600 = vunpack.c.l.b16 %v381
      %v601 = vunpack.c.l.b16 %v382
      %v602 = vunpack.c.l.b16 %v383
      %v603 = vunpack.c.l.b16 %v384
      %v604 = vunpack.c.l.b16 %v385
      %v605 = vunpack.c.l.b16 %v386
      %v606 = vunpack.c.l.b16 %v387
      %v607 = vunpack.c.l.b16 %v388
      %v608 = vunpack.c.l.b16 %v389
      %v609 = vunpack.c.l.b16 %v390
      %v610 = vunpack.c.l.b16 %v391
      %v611 = vunpack.c.l.b16 %v392
      %v612 = vunpack.c.l.b16 %v393
      %v613 = vunpack.c.l.b16 %v394
      %v614 = vunpack.c.l.b16 %v395
      %v615 = vunpack.c.l.b16 %v396
      %v616 = vunpack.c.l.b16 %v397
      %v617 = vunpack.c.l.b16 %v398
      %v618 = vunpack.c.l.b16 %v399
      %v619 = vunpack.c.l.b16 %v400
      %v620 = vunpack.c.l.b16 %v401
      %v621 = vunpack.c.l.b16 %v402
      %v622 = vunpack.c.l.b16 %v403
      %v623 = vunpack.c.l.b16 %v404
      %v624 = vunpack.c.l.b16 %v405
      %v625 = vunpack.c.l.b16 %v406
      %v626 = vunpack.c.l.b16 %v407
      %v627 = vunpack.c.l.b16 %v408
      %v628 = vunpack.c.l.b16 %v409
      %v629 = vunpack.c.l.b16 %v410
      %v630 = vunpack.c.l.b16 %v411
      %v631 = vunpack.c.l.b16 %v412
      %v632 = vunpack.c.l.b16 %v413
      %v633 = vunpack.c.l.b16 %v414
      %v634 = vunpack.c.l.b16 %v415
      %v635 = vunpack.c.l.b16 %v416
      %v636 = vunpack.c.l.b16 %v417
      %v637 = vunpack.c.l.b16 %v418
      %v638 = vunpack.c.l.b16 %v419
      %v639 = vunpack.c.l.b16 %v420
      %v640 = vunpack.c.l.b16 %v421
      %v641 = vunpack.c.l.b16 %v422
      %v642 = vunpack.c.l.b16 %v423
      %v643 = vunpack.c.l.b16 %v424
      %v644 = vunpack.c.l.b16 %v425
      %v645 = vunpack.c.l.b16 %v426
      %v646 = vunpack.c.l.b16 %v427
      %v647 = vunpack.c.l.b16 %v428
      %v648 = vunpack.c.l.b16 %v429
      %v649 = vunpack.c.l.b16 %v430
      %v650 = vunpack.c.l.b16 %v431
      %v651 = vunpack.c.l.b16 %v432
      %v652 = vunpack.c.l.b16 %v433
      %v653 = vunpack.c.l.b16 %v434
      %v654 = vunpack.c.l.b16 %v435
      %v655 = vunpack.c.l.b16 %v436
      %v656 = vunpack.c.l.b16 %v437
      %v657 = vunpack.c.l.b16 %v438
      %v658 = vunpack.c.l.b16 %v439
      %v659 = vunpack.c.l.b16 %v440
      %v660 = vunpack.c.l.b16 %v441
      %v661 = vunpack.c.l.b16 %v442
      %v662 = vunpack.c.l.b16 %v443
      %v663 = vunpack.c.l.b16 %v444
      %v664 = vunpack.c.l.b16 %v445
      %v665 = vunpack.c.l.b16 %v446
      %v666 = vunpack.c.l.b16 %v447
      %v667 = vunpack.c.l.b16 %v448
      %v668 = vunpack.c.l.b16 %v449
      %v669 = vunpack.c.l.b16 %v450
      %v670 = vunpack.c.l.b16 %v451
      %v671 = vunpack.c.l.b16 %v452
      %v672 = vunpack.c.l.b16 %v453
      %v673 = vpack.c.b16 %v594, %v593
      %v674 = vpack.c.b16 %v596, %v595
      %v675 = vpack.c.b16 %v598, %v597
      %v676 = vpack.c.b16 %v600, %v599
      %v677 = vpack.c.b16 %v602, %v601
      %v678 = vpack.c.b16 %v604, %v603
      %v679 = vpack.c.b16 %v606, %v605
      %v680 = vpack.c.b16 %v608, %v607
      %v681 = vpack.c.b16 %v610, %v609
      %v682 = vpack.c.b16 %v612, %v611
      %v683 = vpack.c.b16 %v614, %v613
      %v684 = vpack.c.b16 %v616, %v615
      %v685 = vpack.c.b16 %v618, %v617
      %v686 = vpack.c.b16 %v620, %v619
      %v687 = vpack.c.b16 %v622, %v621
      %v688 = vpack.c.b16 %v624, %v623
      %v689 = vpack.c.b16 %v626, %v625
      %v690 = vpack.c.b16 %v628, %v627
      %v691 = vpack.c.b16 %v630, %v629
      %v692 = vpack.c.b16 %v632, %v631
      %v693 = vpack.c.b16 %v634, %v633
      %v694 = vpack.c.b16 %v636, %v635
      %v695 = vpack.c.b16 %v638, %v637
      %v696 = vpack.c.b16 %v640, %v639
      %v697 = vpack.c.b16 %v642, %v641
      %v698 = vpack.c.b16 %v644, %v643
      %v699 = vpack.c.b16 %v646, %v645
      %v700 = vpack.c.b16 %v648, %v647
      %v701 = vpack.c.b16 %v650, %v649
      %v702 = vpack.c.b16 %v652, %v651
      %v703 = vpack.c.b16 %v654, %v653
      %v704 = vpack.c.b16 %v656, %v655
      %v705 = vpack.c.b16 %v658, %v657
      %v706 = vpack.c.b16 %v660, %v659
      %v707 = vpack.c.b16 %v662, %v661
      %v708 = vpack.c.b16 %v664, %v663
      %v709 = vpack.c.b16 %v666, %v665
      %v710 = vpack.c.b16 %v668, %v667
      %v711 = vpack.c.b16 %v670, %v669
      %v712 = vpack.c.b16 %v672, %v671
      %753 = vmatprep.subr.bf16.mxu0 0
      %754 = vmatpush1.bf16.msra.mxu0 %v673
      %755 = vmatprep.subr.bf16.mxu0 0
      %756 = vmatpush1.bf16.msra.mxu0 %v674
      %757 = vmatprep.subr.bf16.mxu0 0
      %758 = vmatpush1.bf16.msra.mxu0 %v675
      %759 = vmatprep.subr.bf16.mxu0 0
      %760 = vmatpush1.bf16.msra.mxu0 %v676
      %761 = vmatprep.subr.bf16.mxu0 0
      %762 = vmatpush1.bf16.msra.mxu0 %v677
      %763 = vmatprep.subr.bf16.mxu0 0
      %764 = vmatpush1.bf16.msra.mxu0 %v678
      %765 = vmatprep.subr.bf16.mxu0 0
      %766 = vmatpush1.bf16.msra.mxu0 %v679
      %767 = vmatprep.subr.bf16.mxu0 0
      %768 = vmatpush1.bf16.msra.mxu0 %v680
      %769 = vmatprep.subr.bf16.mxu0 0
      %770 = vmatpush1.bf16.msra.mxu0 %v681
      %771 = vmatprep.subr.bf16.mxu0 0
      %772 = vmatpush1.bf16.msra.mxu0 %v682
      %773 = vmatprep.subr.bf16.mxu0 0
      %774 = vmatpush1.bf16.msra.mxu0 %v683
      %775 = vmatprep.subr.bf16.mxu0 0
      %776 = vmatpush1.bf16.msra.mxu0 %v684
      %777 = vmatprep.subr.bf16.mxu0 0
      %778 = vmatpush1.bf16.msra.mxu0 %v685
      %779 = vmatprep.subr.bf16.mxu0 0
      %780 = vmatpush1.bf16.msra.mxu0 %v686
      %781 = vmatprep.subr.bf16.mxu0 0
      %782 = vmatpush1.bf16.msra.mxu0 %v687
      %783 = vmatprep.subr.bf16.mxu0 0
      %784 = vmatpush1.bf16.msra.mxu0 %v688
      %785 = vmatprep.mubr.bf16.mxu0 %v494
      %786 = vmatmul.mubr.bf16.gmra.mrb[0].mxu0 %v493
      %v787 = vpop.f32.mrb[0].mxu0
      %v788 = vadd.f32 %v459, %v787
      %v789 = vpop.f32.mrb[0].mxu0
      %v790 = vpop.f32.mrb[0].mxu0
      %v791 = vadd.f32 %v459, %v790
      %v792 = vpop.f32.mrb[0].mxu0
      %793 = vmatprep.mubr.bf16.mxu0 %v499
      %794 = vmatmul.mubr.bf16.gmra.mrb[0].mxu0 %v498
      %v795 = vpop.f32.mrb[0].mxu0
      %v796 = vadd.f32 %v459, %v795
      %v797 = vpop.f32.mrb[0].mxu0
      %v798 = vpop.f32.mrb[0].mxu0
      %v799 = vadd.f32 %v459, %v798
      %v800 = vpop.f32.mrb[0].mxu0
      %801 = vdwg.mxu0
      %802 = vmatprep.subr.bf16.mxu0 0
      %803 = vmatpush1.bf16.msra.mxu0 %v689
      %804 = vmatprep.subr.bf16.mxu0 0
      %805 = vmatpush1.bf16.msra.mxu0 %v690
      %806 = vmatprep.subr.bf16.mxu0 0
      %807 = vmatpush1.bf16.msra.mxu0 %v691
      %808 = vmatprep.subr.bf16.mxu0 0
      %809 = vmatpush1.bf16.msra.mxu0 %v692
      %810 = vmatprep.subr.bf16.mxu0 0
      %811 = vmatpush1.bf16.msra.mxu0 %v693
      %812 = vmatprep.subr.bf16.mxu0 0
      %813 = vmatpush1.bf16.msra.mxu0 %v694
      %814 = vmatprep.subr.bf16.mxu0 0
      %815 = vmatpush1.bf16.msra.mxu0 %v695
      %816 = vmatprep.subr.bf16.mxu0 0
      %817 = vmatpush1.bf16.msra.mxu0 %v696
      %818 = vmatprep.subr.bf16.mxu0 0
      %819 = vmatpush1.bf16.msra.mxu0 %v697
      %820 = vmatprep.subr.bf16.mxu0 0
      %821 = vmatpush1.bf16.msra.mxu0 %v698
      %822 = vmatprep.subr.bf16.mxu0 0
      %823 = vmatpush1.bf16.msra.mxu0 %v699
      %824 = vmatprep.subr.bf16.mxu0 0
      %825 = vmatpush1.bf16.msra.mxu0 %v700
      %826 = vmatprep.subr.bf16.mxu0 0
      %827 = vmatpush1.bf16.msra.mxu0 %v701
      %828 = vmatprep.subr.bf16.mxu0 0
      %829 = vmatpush1.bf16.msra.mxu0 %v702
      %830 = vmatprep.subr.bf16.mxu0 0
      %831 = vmatpush1.bf16.msra.mxu0 %v703
      %832 = vmatprep.subr.bf16.mxu0 0
      %833 = vmatpush1.bf16.msra.mxu0 %v704
      %834 = vmatprep.mubr.bf16.mxu0 %v496
      %835 = vmatmul.mubr.bf16.gmra.mrb[0].mxu0 %v495
      %v836 = vpop.f32.mrb[0].mxu0
      %v837 = vadd.f32 %v788, %v836
      %v838 = vpop.f32.mrb[0].mxu0
      %v839 = vpop.f32.mrb[0].mxu0
      %v840 = vadd.f32 %v791, %v839
      %v841 = vpop.f32.mrb[0].mxu0
      %842 = vmatprep.mubr.bf16.mxu0 %v501
      %843 = vmatmul.mubr.bf16.gmra.mrb[0].mxu0 %v500
      %v844 = vpop.f32.mrb[0].mxu0
      %v845 = vadd.f32 %v796, %v844
      %v846 = vpop.f32.mrb[0].mxu0
      %v847 = vpop.f32.mrb[0].mxu0
      %v848 = vadd.f32 %v799, %v847
      %v849 = vpop.f32.mrb[0].mxu0
      %850 = vdwg.mxu0
      %851 = vmatprep.subr.bf16.mxu0 0
      %852 = vmatpush1.bf16.msra.mxu0 %v705
      %853 = vmatprep.subr.bf16.mxu0 0
      %854 = vmatpush1.bf16.msra.mxu0 %v706
      %855 = vmatprep.subr.bf16.mxu0 0
      %856 = vmatpush1.bf16.msra.mxu0 %v707
      %857 = vmatprep.subr.bf16.mxu0 0
      %858 = vmatpush1.bf16.msra.mxu0 %v708
      %859 = vmatprep.subr.bf16.mxu0 0
      %860 = vmatpush1.bf16.msra.mxu0 %v709
      %861 = vmatprep.subr.bf16.mxu0 0
      %862 = vmatpush1.bf16.msra.mxu0 %v710
      %863 = vmatprep.subr.bf16.mxu0 0
      %864 = vmatpush1.bf16.msra.mxu0 %v711
      %865 = vmatprep.subr.bf16.mxu0 0
      %866 = vmatpush1.bf16.msra.mxu0 %v712
      %867 = vmatprep.subr.bf16.mxu0 0
      %868 = vmatpush1.bf16.msra.mxu0 0
      %869 = vmatprep.subr.bf16.mxu0 0
      %870 = vmatpush1.bf16.msra.mxu0 0
      %871 = vmatprep.subr.bf16.mxu0 0
      %872 = vmatpush1.bf16.msra.mxu0 0
      %873 = vmatprep.subr.bf16.mxu0 0
      %874 = vmatpush1.bf16.msra.mxu0 0
      %875 = vmatprep.subr.bf16.mxu0 0
      %876 = vmatpush1.bf16.msra.mxu0 0
      %877 = vmatprep.subr.bf16.mxu0 0
      %878 = vmatpush1.bf16.msra.mxu0 0
      %879 = vmatprep.subr.bf16.mxu0 0
      %880 = vmatpush1.bf16.msra.mxu0 0
      %881 = vmatprep.subr.bf16.mxu0 0
      %882 = vmatpush1.bf16.msra.mxu0 0
      %883 = vmatprep.mubr.bf16.mxu0 0
      %884 = vmatmul.mubr.bf16.gmra.mrb[0].mxu0 %v497
      %v885 = vpop.f32.mrb[0].mxu0
      %v886 = vadd.f32 %v837, %v885
      %v887 = vpop.f32.mrb[0].mxu0
      %v888 = vpop.f32.mrb[0].mxu0
      %v889 = vadd.f32 %v840, %v888
      %v890 = vpop.f32.mrb[0].mxu0
      %891 = vmatprep.mubr.bf16.mxu0 0
      %892 = vmatmul.mubr.bf16.gmra.mrb[0].mxu0 %v502
      %v893 = vpop.f32.mrb[0].mxu0
      %v894 = vadd.f32 %v845, %v893
      %v895 = vpop.f32.mrb[0].mxu0
      %v896 = vpop.f32.mrb[0].mxu0
      %v897 = vadd.f32 %v848, %v896
      %v898 = vpop.f32.mrb[0].mxu0
      %899 = vdwg.mxu0
      %v900 = vmax.f32 %v886, 0.0
      %v901 = vmax.f32 %v889, 0.0
      %v902 = vmax.f32 %v894, 0.0
      %v903 = vmax.f32 %v897, 0.0
      %v904 = vpack.c.bf16 %v901, %v900
      %v905 = vpack.c.bf16 %v903, %v902
      %v906 = vld [vmem:[%s4] sm:$0xf]
      %v907 = vld [vmem:[%s4 + $0x4] sm:$0xf]
      %v908 = vld [vmem:[%s4 + $0x8] sm:$0xf]
      %v909 = vld [vmem:[%s4 + $0xc] sm:$0xf]
      %v910 = vld [vmem:[%s4 + $0x10] sm:$0xf]
      %v911 = vld [vmem:[%s4 + $0x14] sm:$0xf]
      %v912 = vld [vmem:[%s4 + $0x18] sm:$0xf]
      %v913 = vld [vmem:[%s4 + $0x1c] sm:$0xf]
      %v914 = vld [vmem:[%s4 + $0x20] sm:$0xf]
      %v915 = vld [vmem:[%s4 + $0x24] sm:$0xf]
      %v916 = vld [vmem:[%s4 + $0x28] sm:$0xf]
      %v917 = vld [vmem:[%s4 + $0x2c] sm:$0xf]
      %v918 = vld [vmem:[%s4 + $0x30] sm:$0xf]
      %v919 = vld [vmem:[%s4 + $0x34] sm:$0xf]
      %v920 = vld [vmem:[%s4 + $0x38] sm:$0xf]
      %v921 = vld [vmem:[%s4 + $0x3c] sm:$0xf]
      %v922 = vld [vmem:[%s5] sm:$0x1]
      %v924 = vlaneseq
      %v925 = vshrl.u32 %v924, 7
      %v926 = vsub.s32 0, %v925
      %v927 = vrot.slane %v922, %v926
      %v945 = vunpack.c.l.b16 %v906
      %v946 = vunpack.c.l.b16 %v907
      %v947 = vunpack.c.l.b16 %v908
      %v948 = vunpack.c.l.b16 %v909
      %v949 = vunpack.c.l.b16 %v910
      %v950 = vunpack.c.l.b16 %v911
      %v951 = vunpack.c.l.b16 %v912
      %v952 = vunpack.c.l.b16 %v913
      %v953 = vunpack.c.l.b16 %v914
      %v954 = vunpack.c.l.b16 %v915
      %v955 = vunpack.c.l.b16 %v916
      %v956 = vunpack.c.l.b16 %v917
      %v957 = vunpack.c.l.b16 %v918
      %v958 = vunpack.c.l.b16 %v919
      %v959 = vunpack.c.l.b16 %v920
      %v960 = vunpack.c.l.b16 %v921
      %v961 = vpack.c.b16 %v946, %v945
      %v962 = vpack.c.b16 %v948, %v947
      %v963 = vpack.c.b16 %v950, %v949
      %v964 = vpack.c.b16 %v952, %v951
      %v965 = vpack.c.b16 %v954, %v953
      %v966 = vpack.c.b16 %v956, %v955
      %v967 = vpack.c.b16 %v958, %v957
      %v968 = vpack.c.b16 %v960, %v959
      %977 = vmatprep.subr.bf16.mxu0 0
      %978 = vmatpush1.bf16.msra.mxu0 %v961
      %979 = vmatprep.subr.bf16.mxu0 0
      %980 = vmatpush1.bf16.msra.mxu0 %v962
      %981 = vmatprep.subr.bf16.mxu0 0
      %982 = vmatpush1.bf16.msra.mxu0 %v963
      %983 = vmatprep.subr.bf16.mxu0 0
      %984 = vmatpush1.bf16.msra.mxu0 %v964
      %985 = vmatprep.subr.bf16.mxu0 0
      %986 = vmatpush1.bf16.msra.mxu0 %v965
      %987 = vmatprep.subr.bf16.mxu0 0
      %988 = vmatpush1.bf16.msra.mxu0 %v966
      %989 = vmatprep.subr.bf16.mxu0 0
      %990 = vmatpush1.bf16.msra.mxu0 %v967
      %991 = vmatprep.subr.bf16.mxu0 0
      %992 = vmatpush1.bf16.msra.mxu0 %v968
      %993 = vmatprep.subr.bf16.mxu0 0
      %994 = vmatpush1.bf16.msra.mxu0 0
      %995 = vmatprep.subr.bf16.mxu0 0
      %996 = vmatpush1.bf16.msra.mxu0 0
      %997 = vmatprep.subr.bf16.mxu0 0
      %998 = vmatpush1.bf16.msra.mxu0 0
      %999 = vmatprep.subr.bf16.mxu0 0
      %1000 = vmatpush1.bf16.msra.mxu0 0
      %1001 = vmatprep.subr.bf16.mxu0 0
      %1002 = vmatpush1.bf16.msra.mxu0 0
      %1003 = vmatprep.subr.bf16.mxu0 0
      %1004 = vmatpush1.bf16.msra.mxu0 0
      %1005 = vmatprep.subr.bf16.mxu0 0
      %1006 = vmatpush1.bf16.msra.mxu0 0
      %1007 = vmatprep.subr.bf16.mxu0 0
      %1008 = vmatpush1.bf16.msra.mxu0 0
      %1009 = vmatprep.mubr.bf16.mxu0 0
      %1010 = vmatmul.mubr.bf16.gmra.mrb[0].mxu0 %v904
      %v1011 = vpop.f32.mrb[0].mxu0
      %v1012 = vadd.f32 %v927, %v1011
      %v1013 = vpop.f32.mrb[0].mxu0
      %v1014 = vpop.f32.mrb[0].mxu0
      %v1015 = vadd.f32 %v927, %v1014
      %v1016 = vpop.f32.mrb[0].mxu0
      %1017 = vmatprep.mubr.bf16.mxu0 0
      %1018 = vmatmul.mubr.bf16.gmra.mrb[0].mxu0 %v905
      %v1019 = vpop.f32.mrb[0].mxu0
      %v1020 = vadd.f32 %v927, %v1019
      %v1021 = vpop.f32.mrb[0].mxu0
      %v1022 = vpop.f32.mrb[0].mxu0
      %v1023 = vadd.f32 %v927, %v1022
      %v1024 = vpop.f32.mrb[0].mxu0
      %1025 = vdwg.mxu0
      %v1026 = vmax.f32 %v1012, 0.0
      %v1027 = vmax.f32 %v1015, 0.0
      %v1028 = vmax.f32 %v1020, 0.0
      %v1029 = vmax.f32 %v1023, 0.0
      %v1030 = vpack.c.bf16 %v1027, %v1026
      %v1031 = vpack.c.bf16 %v1029, %v1028
      %v1032 = vld [vmem:[%s6] sm:$0xf]
      %v1033 = vld [vmem:[%s6 + $0x4] sm:$0xf]
      %v1034 = vld [vmem:[%s6 + $0x8] sm:$0xf]
      %v1035 = vld [vmem:[%s6 + $0xc] sm:$0xf]
      %v1036 = vld [vmem:[%s6 + $0x10] sm:$0xf]
      %v1037 = vld [vmem:[%s6 + $0x14] sm:$0xf]
      %v1038 = vld [vmem:[%s6 + $0x18] sm:$0xf]
      %v1039 = vld [vmem:[%s6 + $0x1c] sm:$0xf]
      %v1040 = vld [vmem:[%s6 + $0x20] sm:$0xf]
      %v1041 = vld [vmem:[%s6 + $0x24] sm:$0xf]
      %v1042 = vld [vmem:[%s6 + $0x28] sm:$0xf]
      %v1043 = vld [vmem:[%s6 + $0x2c] sm:$0xf]
      %v1044 = vld [vmem:[%s6 + $0x30] sm:$0xf]
      %v1045 = vld [vmem:[%s6 + $0x34] sm:$0xf]
      %v1046 = vld [vmem:[%s6 + $0x38] sm:$0xf]
      %v1047 = vld [vmem:[%s6 + $0x3c] sm:$0xf]
      %v1048 = vld [vmem:[%s353] sm:$0xf]
      %v1049 = vld [vmem:[%s353 + $0x4] sm:$0xf]
      %v1050 = vld [vmem:[%s353 + $0x8] sm:$0xf]
      %v1051 = vld [vmem:[%s353 + $0xc] sm:$0xf]
      %v1052 = vld [vmem:[%s7] sm:$0xf]
      %v1053 = vld [vmem:[%s7 + $0x4] sm:$0xf]
      %v1054 = vld [vmem:[%s7 + $0x8] sm:$0xf]
      %v1055 = vld [vmem:[%s7 + $0xc] sm:$0xf]
      %v1056 = vld [vmem:[%s7 + $0x10] sm:$0xf]
      %v1057 = vld [vmem:[%s7 + $0x14] sm:$0xf]
      %v1058 = vld [vmem:[%s7 + $0x18] sm:$0xf]
      %v1059 = vld [vmem:[%s7 + $0x1c] sm:$0xf]
      %v1060 = vld [vmem:[%s7 + $0x20] sm:$0xf]
      %v1061 = vld [vmem:[%s7 + $0x24] sm:$0xf]
      %v1062 = vld [vmem:[%s7 + $0x28] sm:$0xf]
      %v1063 = vld [vmem:[%s7 + $0x2c] sm:$0xf]
      %v1064 = vld [vmem:[%s7 + $0x30] sm:$0xf]
      %v1065 = vld [vmem:[%s7 + $0x34] sm:$0xf]
      %v1066 = vld [vmem:[%s7 + $0x38] sm:$0xf]
      %v1067 = vld [vmem:[%s7 + $0x3c] sm:$0xf]
      %v1072 = vunpack.c.l.b16 %v1048
      %v1073 = vunpack.c.l.b16 %v1049
      %v1074 = vunpack.c.l.b16 %v1050
      %v1075 = vunpack.c.l.b16 %v1051
      %v1076 = vpack.c.b16 %v1073, %v1072
      %v1077 = vpack.c.b16 %v1075, %v1074
      %v1096 = vunpack.c.l.b16 %v1052
      %v1097 = vunpack.c.l.b16 %v1053
      %v1098 = vunpack.c.l.b16 %v1054
      %v1099 = vunpack.c.l.b16 %v1055
      %v1100 = vunpack.c.l.b16 %v1056
      %v1101 = vunpack.c.l.b16 %v1057
      %v1102 = vunpack.c.l.b16 %v1058
      %v1103 = vunpack.c.l.b16 %v1059
      %v1104 = vunpack.c.l.b16 %v1060
      %v1105 = vunpack.c.l.b16 %v1061
      %v1106 = vunpack.c.l.b16 %v1062
      %v1107 = vunpack.c.l.b16 %v1063
      %v1108 = vunpack.c.l.b16 %v1064
      %v1109 = vunpack.c.l.b16 %v1065
      %v1110 = vunpack.c.l.b16 %v1066
      %v1111 = vunpack.c.l.b16 %v1067
      %v1112 = vpack.c.b16 %v1097, %v1096
      %v1113 = vpack.c.b16 %v1099, %v1098
      %v1114 = vpack.c.b16 %v1101, %v1100
      %v1115 = vpack.c.b16 %v1103, %v1102
      %v1116 = vpack.c.b16 %v1105, %v1104
      %v1117 = vpack.c.b16 %v1107, %v1106
      %v1118 = vpack.c.b16 %v1109, %v1108
      %v1119 = vpack.c.b16 %v1111, %v1110
      %1128 = vmatprep.subr.bf16.mxu0 0
      %1129 = vmatpush1.bf16.msra.mxu0 %v1112
      %1130 = vmatprep.subr.bf16.mxu0 0
      %1131 = vmatpush1.bf16.msra.mxu0 %v1113
      %1132 = vmatprep.subr.bf16.mxu0 0
      %1133 = vmatpush1.bf16.msra.mxu0 %v1114
      %1134 = vmatprep.subr.bf16.mxu0 0
      %1135 = vmatpush1.bf16.msra.mxu0 %v1115
      %1136 = vmatprep.subr.bf16.mxu0 0
      %1137 = vmatpush1.bf16.msra.mxu0 %v1116
      %1138 = vmatprep.subr.bf16.mxu0 0
      %1139 = vmatpush1.bf16.msra.mxu0 %v1117
      %1140 = vmatprep.subr.bf16.mxu0 0
      %1141 = vmatpush1.bf16.msra.mxu0 %v1118
      %1142 = vmatprep.subr.bf16.mxu0 0
      %1143 = vmatpush1.bf16.msra.mxu0 %v1119
      %1144 = vmatprep.subr.bf16.mxu0 0
      %1145 = vmatpush1.bf16.msra.mxu0 0
      %1146 = vmatprep.subr.bf16.mxu0 0
      %1147 = vmatpush1.bf16.msra.mxu0 0
      %1148 = vmatprep.subr.bf16.mxu0 0
      %1149 = vmatpush1.bf16.msra.mxu0 0
      %1150 = vmatprep.subr.bf16.mxu0 0
      %1151 = vmatpush1.bf16.msra.mxu0 0
      %1152 = vmatprep.subr.bf16.mxu0 0
      %1153 = vmatpush1.bf16.msra.mxu0 0
      %1154 = vmatprep.subr.bf16.mxu0 0
      %1155 = vmatpush1.bf16.msra.mxu0 0
      %1156 = vmatprep.subr.bf16.mxu0 0
      %1157 = vmatpush1.bf16.msra.mxu0 0
      %1158 = vmatprep.subr.bf16.mxu0 0
      %1159 = vmatpush1.bf16.msra.mxu0 0
      %1160 = vmatprep.mubr.bf16.mxu0 0
      %1161 = vmatmul.mubr.bf16.gmra.mrb[0].mxu0 %v1076
      %v1162 = vpop.f32.mrb[0].mxu0
      %v1163 = vadd.f32 0.0, %v1162
      %v1164 = vpop.f32.mrb[0].mxu0
      %v1165 = vpop.f32.mrb[0].mxu0
      %v1166 = vadd.f32 0.0, %v1165
      %v1167 = vpop.f32.mrb[0].mxu0
      %1168 = vmatprep.mubr.bf16.mxu0 0
      %1169 = vmatmul.mubr.bf16.gmra.mrb[0].mxu0 %v1077
      %v1170 = vpop.f32.mrb[0].mxu0
      %v1171 = vadd.f32 0.0, %v1170
      %v1172 = vpop.f32.mrb[0].mxu0
      %v1173 = vpop.f32.mrb[0].mxu0
      %v1174 = vadd.f32 0.0, %v1173
      %v1175 = vpop.f32.mrb[0].mxu0
      %1176 = vdwg.mxu0
      %v1193 = vunpack.c.l.b16 %v1032
      %v1194 = vunpack.c.l.b16 %v1033
      %v1195 = vunpack.c.l.b16 %v1034
      %v1196 = vunpack.c.l.b16 %v1035
      %v1197 = vunpack.c.l.b16 %v1036
      %v1198 = vunpack.c.l.b16 %v1037
      %v1199 = vunpack.c.l.b16 %v1038
      %v1200 = vunpack.c.l.b16 %v1039
      %v1201 = vunpack.c.l.b16 %v1040
      %v1202 = vunpack.c.l.b16 %v1041
      %v1203 = vunpack.c.l.b16 %v1042
      %v1204 = vunpack.c.l.b16 %v1043
      %v1205 = vunpack.c.l.b16 %v1044
      %v1206 = vunpack.c.l.b16 %v1045
      %v1207 = vunpack.c.l.b16 %v1046
      %v1208 = vunpack.c.l.b16 %v1047
      %v1209 = vpack.c.b16 %v1194, %v1193
      %v1210 = vpack.c.b16 %v1196, %v1195
      %v1211 = vpack.c.b16 %v1198, %v1197
      %v1212 = vpack.c.b16 %v1200, %v1199
      %v1213 = vpack.c.b16 %v1202, %v1201
      %v1214 = vpack.c.b16 %v1204, %v1203
      %v1215 = vpack.c.b16 %v1206, %v1205
      %v1216 = vpack.c.b16 %v1208, %v1207
      %1225 = vmatprep.subr.bf16.mxu0 0
      %1226 = vmatpush1.bf16.msra.mxu0 %v1209
      %1227 = vmatprep.subr.bf16.mxu0 0
      %1228 = vmatpush1.bf16.msra.mxu0 %v1210
      %1229 = vmatprep.subr.bf16.mxu0 0
      %1230 = vmatpush1.bf16.msra.mxu0 %v1211
      %1231 = vmatprep.subr.bf16.mxu0 0
      %1232 = vmatpush1.bf16.msra.mxu0 %v1212
      %1233 = vmatprep.subr.bf16.mxu0 0
      %1234 = vmatpush1.bf16.msra.mxu0 %v1213
      %1235 = vmatprep.subr.bf16.mxu0 0
      %1236 = vmatpush1.bf16.msra.mxu0 %v1214
      %1237 = vmatprep.subr.bf16.mxu0 0
      %1238 = vmatpush1.bf16.msra.mxu0 %v1215
      %1239 = vmatprep.subr.bf16.mxu0 0
      %1240 = vmatpush1.bf16.msra.mxu0 %v1216
      %1241 = vmatprep.subr.bf16.mxu0 0
      %1242 = vmatpush1.bf16.msra.mxu0 0
      %1243 = vmatprep.subr.bf16.mxu0 0
      %1244 = vmatpush1.bf16.msra.mxu0 0
      %1245 = vmatprep.subr.bf16.mxu0 0
      %1246 = vmatpush1.bf16.msra.mxu0 0
      %1247 = vmatprep.subr.bf16.mxu0 0
      %1248 = vmatpush1.bf16.msra.mxu0 0
      %1249 = vmatprep.subr.bf16.mxu0 0
      %1250 = vmatpush1.bf16.msra.mxu0 0
      %1251 = vmatprep.subr.bf16.mxu0 0
      %1252 = vmatpush1.bf16.msra.mxu0 0
      %1253 = vmatprep.subr.bf16.mxu0 0
      %1254 = vmatpush1.bf16.msra.mxu0 0
      %1255 = vmatprep.subr.bf16.mxu0 0
      %1256 = vmatpush1.bf16.msra.mxu0 0
      %1257 = vmatprep.mubr.bf16.mxu0 0
      %1258 = vmatmul.mubr.bf16.gmra.mrb[0].mxu0 %v1030
      %v1259 = vpop.f32.mrb[0].mxu0
      %v1260 = vadd.f32 %v1163, %v1259
      %v1261 = vpop.f32.mrb[0].mxu0
      %v1262 = vpop.f32.mrb[0].mxu0
      %v1263 = vadd.f32 %v1166, %v1262
      %v1264 = vpop.f32.mrb[0].mxu0
      %1265 = vmatprep.mubr.bf16.mxu0 0
      %1266 = vmatmul.mubr.bf16.gmra.mrb[0].mxu0 %v1031
      %v1267 = vpop.f32.mrb[0].mxu0
      %v1268 = vadd.f32 %v1171, %v1267
      %v1269 = vpop.f32.mrb[0].mxu0
      %v1270 = vpop.f32.mrb[0].mxu0
      %v1271 = vadd.f32 %v1174, %v1270
      %v1272 = vpop.f32.mrb[0].mxu0
      %1273 = vdwg.mxu0
      %v1274 = vld [vmem:[%s8] sm:$0x1]
      %v1276 = vlaneseq
      %v1277 = vshrl.u32 %v1276, 7
      %v1278 = vsub.s32 0, %v1277
      %v1279 = vrot.slane %v1274, %v1278
      %v1281 = vadd.f32 %v1260, %v1279
      %v1282 = vadd.f32 %v1263, %v1279
      %v1283 = vadd.f32 %v1268, %v1279
      %v1284 = vadd.f32 %v1271, %v1279
      %1285 = vst [vmem:[%s359] sm:$0xff] %v1281
      %1286 = vst [vmem:[%s359 + $0x8] sm:$0xff] %v1282
      %1287 = vst [vmem:[%s359 + $0x10] sm:$0xff] %v1283
      %1288 = vst [vmem:[%s359 + $0x18] sm:$0xff] %v1284
      %s1289 = smul.u32 4, %s20
      %p1290 = scmp.lt.s32.totalorder %s1289, 7
      %s1291 = scalar_select %p1290, %s1289, 7
      %s1292 = smul.addr %s1291, 8
      %s1293 = scalar_lea.vmem %s9, %s1292
      // Predicated region
      $region57: #{ehr_forward.1} parent=55 // pred_check
        %p1294 = pneg %p237
      $region58: #{ehr_forward.1} parent=55 // pred_check_branch
        %1296 = sbr.rel (%p1294) target = $region60
      $region59: #{ehr_forward.1} parent=55 // pred_region
        %s1297 = smul.u32 4, %s20
      $region60: #{ehr_forward.1} parent=55 // pred_fallthru
        _
    $region56: #{ehr_forward.1} parent=5 // pred_fallthru
      _
    %p1298 = scmp.le.s32.totalorder 2, %s15
    // Predicated region
    $region61: #{ehr_forward.1} parent=5 // pred_check
      %p1299 = pneg %p1298
    $region62: #{ehr_forward.1} parent=5 // pred_check_branch
      %1301 = sbr.rel (%p1299) target = $region64
    $region63: #{ehr_forward.1} parent=5 // pred_region
      %s1302 = ssub.s32 %s15, 2
      // Predicated region
      $region65: #{ehr_forward.1} parent=63 // pred_check
        %p1303 = pneg %p243
      $region66: #{ehr_forward.1} parent=63 // pred_check_branch
        %1305 = sbr.rel (%p1303) target = $region68
      $region67: #{ehr_forward.1} parent=63 // pred_region
        %s1306 = smul.u32 4, %s21
        %p1307 = scmp.lt.s32.totalorder %s1306, 7
        %s1308 = scalar_select %p1307, %s1306, 7
        %s1309 = smul.addr %s1308, 8
        %s1310 = scalar_lea.vmem %s9, %s1309
      $region68: #{ehr_forward.1} parent=63 // pred_fallthru
        _
    $region64: #{ehr_forward.1} parent=5 // pred_fallthru
      _
  $region6: #{ehr_forward.1} parent=0 // loop_footer
    %s19 = sadd.s32 1, %s15
  $region7: #{ehr_forward.1} parent=0 // loop_footer_branch
    %14 = sbr.rel target = $region3
  $region8: #{ehr_forward.1} parent=0 // loop_exit
    _

</llo_original>
